<compile_context>
chip_gen: v5e
topology: v5e:2x2
jax: 0.10.0
libtpu: 0.0.40
codegen_flags: <defaults>
</compile_context>

<pallas_src>
import functools
import numpy as np
import jax
import jax.numpy as jnp
from jax.experimental import pallas as pl
from jax.experimental.pallas import tpu as pltpu

ACCEPTANCE_OVERLAP = 0.1
RRE_THRESHOLD = 5.0   # degrees
RTE_THRESHOLD = 2.0   # meters
HIT_THRESHOLD = 0.5   # unused by forward (keypoint_repeatability only)

_G_BLOCK = 512        # gt-key lane tile per grid step (keeps (Q, GB) i32 small)
_Q_ALIGN = 8          # sublane alignment for predicted correspondences
_OUT_LANES = 128      # lane-dense per-sample output row


# ----------------------------------------------------------------------------
# Fused kernel: PIR hit accumulation + transform errors (coarse & refined).
#
# PIR (no scatter): gt correspondences and predictions are packed wrapper-side
# into single i32 keys (ref*65536 + src).  gt keys with overlap <= threshold and
# gt padding are -1; predicted padding is -2 (can never match anything).
#   hit[q]  = OR over G blocks of (q_key[q] == gt_key[g])
#   PIR     = sum(hit) / true_q_count          (division done outside kernel)
# Transform error: trace(T[:3,:3].T @ G[:3,:3]) == sum(T[:3,:3] * G[:3,:3]);
# rte = || G[:3,3] - T[:3,3] ||.  arccos / deg scaling done outside (in jit).
# ----------------------------------------------------------------------------
def _fused_eval_kernel(gt_key_ref, q_key_ref, tfs_ref, out_ref, hit_ref):
    # gt_key_ref: (1, GB)  i32   one G block of packed+masked gt keys
    # q_key_ref:  (Qp, 1)  i32   packed predicted keys (padded rows = -2)
    # tfs_ref:    (3, 16)  f32   rows = [gt, coarse, refined] 4x4 row-major
    # out_ref:    (1, 128) f32   [hit_sum, cos_c, rte_c, cos_r, rte_r, 0...]
    # hit_ref:    (Qp, 1)  i32   scratch hit accumulator (persists across G blocks)
    g = pl.program_id(1)

    @pl.when(g == 0)
    def _init():
        hit_ref[...] = jnp.zeros_like(hit_ref)

    # ---- coarse-inlier hits for this G block (one compare + one lane reduce) ---
    q_keys = q_key_ref[...]                                     # (Qp, 1)
    gt_keys = gt_key_ref[...]                                   # (1, GB)
    match = (q_keys == gt_keys).astype(jnp.int32)               # (Qp, GB)
    hit_ref[...] = jnp.maximum(hit_ref[...],
                               jnp.max(match, axis=1, keepdims=True))

    # ---- finalize on the last G block -----------------------------------------
    @pl.when(g == pl.num_programs(1) - 1)
    def _finalize():
        hit_sum = jnp.sum(hit_ref[...].astype(jnp.float32),
                          axis=0, keepdims=True)                # (1, 1)

        tfs = tfs_ref[...]                                      # (3, 16)
        gt = tfs[0:1, :]                                        # (1, 16)
        lane16 = jax.lax.broadcasted_iota(jnp.int32, (1, 16), 1)
        col = lane16 % 4
        rot_mask = jnp.logical_and(lane16 < 12, col < 3)        # R[:3, :3] entries
        t_mask = jnp.logical_and(lane16 < 12, col == 3)         # t[:3] entries

        def tf_err(tf):
            trace = jnp.sum(jnp.where(rot_mask, gt * tf, 0.0),
                            axis=1, keepdims=True)              # (1, 1)
            cos = jnp.clip(0.5 * (trace - 1.0), -1.0, 1.0)
            diff = jnp.where(t_mask, gt - tf, 0.0)
            rte = jnp.sqrt(jnp.sum(diff * diff, axis=1, keepdims=True))
            return cos, rte

        cos_c, rte_c = tf_err(tfs[1:2, :])                      # coarse estimate
        cos_r, rte_r = tf_err(tfs[2:3, :])                      # refined estimate

        lane = jax.lax.broadcasted_iota(jnp.int32, (1, _OUT_LANES), 1)
        out = (jnp.where(lane == 0, hit_sum, 0.0)
               + jnp.where(lane == 1, cos_c, 0.0)
               + jnp.where(lane == 2, rte_c, 0.0)
               + jnp.where(lane == 3, cos_r, 0.0)
               + jnp.where(lane == 4, rte_r, 0.0))
        out_ref[...] = out


# ----------------------------------------------------------------------------
# Single jitted device function (one dispatch per batch): kernel + epilogue.
# Compiled once per (B, G bucket, Q bucket).
# ----------------------------------------------------------------------------
@functools.partial(jax.jit, static_argnames=('rre_threshold', 'rte_threshold'))
def _evaluator_device_fn(gt_keys, q_keys, tfs, q_counts,
                         rre_threshold=RRE_THRESHOLD, rte_threshold=RTE_THRESHOLD):
    # gt_keys:  (B, 1, Gp) i32   Gp multiple of _G_BLOCK
    # q_keys:   (B, Qp, 1) i32   Qp multiple of 8
    # tfs:      (B, 3, 16) f32
    # q_counts: (B,)       f32   true number of predicted correspondences
    B = gt_keys.shape[0]
    g_pad = gt_keys.shape[2]
    q_pad = q_keys.shape[1]
    num_g_blocks = g_pad // _G_BLOCK

    res = pl.pallas_call(
        _fused_eval_kernel,
        out_shape=jax.ShapeDtypeStruct((B, 1, _OUT_LANES), jnp.float32),
        grid_spec=pltpu.PrefetchScalarGridSpec(
            num_scalar_prefetch=0,
            grid=(B, num_g_blocks),
            in_specs=[
                pl.BlockSpec((None, 1, _G_BLOCK), lambda b, g: (b, 0, g)),
                pl.BlockSpec((None, q_pad, 1), lambda b, g: (b, 0, 0)),
                pl.BlockSpec((None, 3, 16), lambda b, g: (b, 0, 0)),
            ],
            out_specs=pl.BlockSpec((None, 1, _OUT_LANES), lambda b, g: (b, 0, 0)),
            scratch_shapes=[pltpu.VMEM((q_pad, 1), jnp.int32)],
        ),
        compiler_params=pltpu.CompilerParams(
            dimension_semantics=("parallel", "arbitrary")),
    )(gt_keys, q_keys, tfs)

    vals = res[:, 0, :]                                   # (B, 128)
    pir = vals[:, 0] / q_counts                           # true-Q mean
    re = 180.0 * jnp.arccos(vals[:, 1]) / np.pi           # coarse rotation error
    te = vals[:, 2]                                       # coarse translation error
    rre = 180.0 * jnp.arccos(vals[:, 3]) / np.pi          # refined rotation error
    rte = vals[:, 4]                                      # refined translation error
    pmr = (pir > 0.2).astype(jnp.float32)
    recall = jnp.logical_and(rre < rre_threshold, rte < rte_threshold)
    rr = recall.astype(jnp.float32)
    # Per-sample metric row: [PIR, RE, TE, RRE, RTE, PMR, RR]
    return jnp.stack([pir, re, te, rre, rte, pmr, rr], axis=1)


# ----------------------------------------------------------------------------
# Host-side packing (eager jnp, stays on device; keys assume patch ids < 2**15).
# ----------------------------------------------------------------------------
def _round_up(n, m):
    return max(m, ((int(n) + m - 1) // m) * m)


def _pack_batch(samples, acceptance_overlap):
    g_pad = _round_up(max(int(s['gt_patch_corr_indices'].shape[0]) for s in samples),
                      _G_BLOCK)
    q_pad = _round_up(max(int(s['ref_patch_corr_indices'].shape[0]) for s in samples),
                      _Q_ALIGN)
    gt_list, q_list, tf_list, q_counts = [], [], [], []
    for s in samples:
        gt_idx = jnp.asarray(s['gt_patch_corr_indices'], dtype=jnp.int32)    # (G, 2)
        ov = jnp.asarray(s['gt_patch_corr_overlaps'], dtype=jnp.float32)     # (G,)
        ref_q = jnp.asarray(s['ref_patch_corr_indices'], dtype=jnp.int32)    # (Q,)
        src_q = jnp.asarray(s['src_patch_corr_indices'], dtype=jnp.int32)    # (Q,)
        G = int(gt_idx.shape[0])
        Q = int(ref_q.shape[0])
        # gt keys: overlap mask folded in (sentinel -1); padding also -1.
        gt_key = jnp.where(ov > acceptance_overlap,
                           gt_idx[:, 0] * 65536 + gt_idx[:, 1],
                           jnp.int32(-1)).astype(jnp.int32)
        gt_key = jnp.pad(gt_key, (0, g_pad - G), constant_values=-1)
        # predicted keys: padding sentinel -2 never matches any gt key.
        q_key = (ref_q * 65536 + src_q).astype(jnp.int32)
        q_key = jnp.pad(q_key, (0, q_pad - Q), constant_values=-2)
        tfs = jnp.stack([jnp.asarray(s['gt_transform'], dtype=jnp.float32),
                         jnp.asarray(s['transform'], dtype=jnp.float32),
                         jnp.asarray(s['refined_transform'], dtype=jnp.float32)],
                        axis=0).reshape(3, 16)
        gt_list.append(gt_key.reshape(1, g_pad))
        q_list.append(q_key.reshape(q_pad, 1))
        tf_list.append(tfs)
        q_counts.append(float(Q))
    return (jnp.stack(gt_list), jnp.stack(q_list), jnp.stack(tf_list),
            jnp.asarray(q_counts, dtype=jnp.float32))


# ----------------------------------------------------------------------------
# Evaluator (outdoor scene, eval mode)
# ----------------------------------------------------------------------------
class Evaluator:
    def __init__(self, hit_threshold=HIT_THRESHOLD, acceptance_overlap=ACCEPTANCE_OVERLAP,
                 rre_threshold=RRE_THRESHOLD, rte_threshold=RTE_THRESHOLD):
        self.hit_threshold = hit_threshold
        self.acceptance_overlap = acceptance_overlap
        self.inlier_ratio_threshold = 0.05
        self.rre_threshold = float(rre_threshold)
        self.rte_threshold = float(rte_threshold)
        self.scene = 'outdoor'
        self.training = False
        # TODO(synk): indoor branch (compute_rmse) needs a rotation->quaternion
        # conversion (scipy) and is not exercised by the outdoor forward path.

    def _device_eval(self, samples):
        gt_keys, q_keys, tfs, q_counts = _pack_batch(samples, self.acceptance_overlap)
        return _evaluator_device_fn(gt_keys, q_keys, tfs, q_counts,
                                    rre_threshold=self.rre_threshold,
                                    rte_threshold=self.rte_threshold)

    def _build_results(self, row):
        # row = [PIR, RE, TE, RRE, RTE, PMR, RR]  (numpy, already on host)
        pir, re, te, rre, rte, pmr, rr = (float(v) for v in row)
        results = {'PIR': pir}
        if not self.training:
            results['PMR'] = pmr
        # Data-dependent dict structure (mirrors `.item()` in the PyTorch module).
        if self.training or rr > 0.5:
            results['RE'] = re
            results['TE'] = te
            results['RRE'] = rre
            results['RTE'] = rte
        if not self.training:
            results['RR'] = rr
        return results

    def __call__(self, output_dict):
        metrics = np.asarray(jax.device_get(self._device_eval([output_dict])))
        return self._build_results(metrics[0])

    def forward_batch(self, output_dicts):
        """Evaluate B samples with one pallas_call / one dispatch / one D2H sync."""
        metrics = np.asarray(jax.device_get(self._device_eval(list(output_dicts))))
        return [self._build_results(row) for row in metrics]


# ----------------------------------------------------------------------------
# Reference (pure numpy, mirrors the PyTorch code) for correctness checking.
# ----------------------------------------------------------------------------
def _ref_pir(gt_idx, overlaps, ref_q, src_q, ref_len, src_len, acc):
    m = overlaps > acc
    idx = gt_idx[m]
    mp = np.zeros((ref_len, src_len), dtype=np.float32)
    mp[idx[:, 0], idx[:, 1]] = 1.0
    return mp[ref_q, src_q].mean()


def _ref_transform_error(gt, tf):
    rre = 0.5 * (np.trace(tf[:3, :3].T @ gt[:3, :3]) - 1.0)
    rre = 180.0 * np.arccos(np.clip(rre, -1.0, 1.0)) / np.pi
    rte = np.linalg.norm(gt[:3, 3] - tf[:3, 3])
    return rte, rre


def _rot(ax, ay, az):
    cx, sx = np.cos(ax), np.sin(ax)
    cy, sy = np.cos(ay), np.sin(ay)
    cz, sz = np.cos(az), np.sin(az)
    Rx = np.array([[1, 0, 0], [0, cx, -sx], [0, sx, cx]])
    Ry = np.array([[cy, 0, sy], [0, 1, 0], [-sy, 0, cy]])
    Rz = np.array([[cz, -sz, 0], [sz, cz, 0], [0, 0, 1]])
    return (Rz @ Ry @ Rx).astype(np.float32)


if __name__ == "__main__":
    key = jax.random.PRNGKey(0)
    k1, k2, k3, k4, k5, k6, k7 = jax.random.split(key, 7)

    G, Q = 128, 16          # gt correspondences, predicted correspondences
    ref_len, src_len = 24, 20

    gt_idx = jnp.stack([jax.random.randint(k1, (G,), 0, ref_len),
                        jax.random.randint(k2, (G,), 0, src_len)], axis=1).astype(jnp.int32)
    overlaps = jax.random.uniform(k3, (G,), dtype=jnp.float32)

    # predictions: half sampled from the gt pairs, half random
    sel = jax.random.randint(k4, (Q,), 0, G)
    ref_q = gt_idx[sel, 0]
    src_q = gt_idx[sel, 1]
    take_rand = (jnp.arange(Q) % 2) == 0
    ref_q = jnp.where(take_rand, jax.random.randint(k5, (Q,), 0, ref_len), ref_q).astype(jnp.int32)
    src_q = jnp.where(take_rand, jax.random.randint(k6, (Q,), 0, src_len), src_q).astype(jnp.int32)

    # deterministic transforms derived from the key
    angs = np.asarray(jax.device_get(jax.random.uniform(k7, (9,), minval=-0.3, maxval=0.3)))
    gt_T = np.eye(4, dtype=np.float32)
    gt_T[:3, :3] = _rot(angs[0], angs[1], angs[2])
    gt_T[:3, 3] = np.array([1.0, -0.5, 0.25], dtype=np.float32)

    est_T = np.eye(4, dtype=np.float32)   # coarse estimate: noticeably off
    est_T[:3, :3] = _rot(angs[0] + 0.05, angs[1] - 0.03, angs[2] + 0.04)
    est_T[:3, 3] = gt_T[:3, 3] + np.array([0.3, -0.2, 0.1], dtype=np.float32)

    ref_T = np.eye(4, dtype=np.float32)   # refined estimate: very close to gt
    ref_T[:3, :3] = _rot(angs[0] + 0.005, angs[1] + 0.004, angs[2] - 0.003)
    ref_T[:3, 3] = gt_T[:3, 3] + np.array([0.02, -0.01, 0.015], dtype=np.float32)

    output_dict = {
        'gt_patch_corr_indices': gt_idx,
        'gt_patch_corr_overlaps': overlaps,
        'ref_patch_corr_indices': ref_q,
        'src_patch_corr_indices': src_q,
        'gt_transform': jnp.asarray(gt_T),
        'transform': jnp.asarray(est_T),
        'refined_transform': jnp.asarray(ref_T),
    }

    evaluator = Evaluator()

    # run the fused kernel once at the device level and block on the result
    raw = evaluator._device_eval([output_dict])
    jax.block_until_ready(raw)

    results = evaluator(output_dict)

    # ---- correctness check against the numpy reference of the PyTorch code ----
    gt_idx_np, overlaps_np = np.asarray(gt_idx), np.asarray(overlaps)
    ref_q_np, src_q_np = np.asarray(ref_q), np.asarray(src_q)
    pir_ref = _ref_pir(gt_idx_np, overlaps_np, ref_q_np, src_q_np,
                       ref_len, src_len, ACCEPTANCE_OVERLAP)
    te_ref, re_ref = _ref_transform_error(gt_T, est_T)
    rte_ref, rre_ref = _ref_transform_error(gt_T, ref_T)

    np.testing.assert_allclose(results['PIR'], pir_ref, rtol=1e-5, atol=1e-6)
    np.testing.assert_allclose(results['PMR'], float(pir_ref > 0.2), atol=0)
    rr_ref = float((rre_ref < RRE_THRESHOLD) and (rte_ref < RTE_THRESHOLD))
    np.testing.assert_allclose(results['RR'], rr_ref, atol=0)
    if 'RTE' in results:
        np.testing.assert_allclose(results['TE'], te_ref, rtol=1e-4, atol=1e-5)
        np.testing.assert_allclose(results['RE'], re_ref, rtol=1e-3, atol=1e-3)
        np.testing.assert_allclose(results['RTE'], rte_ref, rtol=1e-4, atol=1e-5)
        np.testing.assert_allclose(results['RRE'], rre_ref, rtol=1e-3, atol=1e-3)

    # ---- batched path: 2 samples, one pallas_call, one D2H sync -----------------
    Q2 = 12                                 # non-multiple-of-8 -> exercises padding
    ref_T2 = np.array(ref_T)
    ref_T2[:3, 3] += np.array([5.0, 0.0, 0.0], dtype=np.float32)   # recall -> False
    output_dict2 = dict(output_dict)
    output_dict2['ref_patch_corr_indices'] = ref_q[:Q2]
    output_dict2['src_patch_corr_indices'] = src_q[:Q2]
    output_dict2['refined_transform'] = jnp.asarray(ref_T2)

    batch_results = evaluator.forward_batch([output_dict, output_dict2])
    r1, r2 = batch_results

    np.testing.assert_allclose(r1['PIR'], results['PIR'], rtol=1e-6, atol=1e-7)
    pir_ref2 = _ref_pir(gt_idx_np, overlaps_np, ref_q_np[:Q2], src_q_np[:Q2],
                        ref_len, src_len, ACCEPTANCE_OVERLAP)
    np.testing.assert_allclose(r2['PIR'], pir_ref2, rtol=1e-5, atol=1e-6)
    rte_ref2, rre_ref2 = _ref_transform_error(gt_T, ref_T2)
    rr_ref2 = float((rre_ref2 < RRE_THRESHOLD) and (rte_ref2 < RTE_THRESHOLD))
    np.testing.assert_allclose(r2['RR'], rr_ref2, atol=0)
    assert ('RTE' in r2) == (rr_ref2 > 0.5)   # data-dependent dict structure

    print("KERNEL_OK")
</pallas_src>

<mosaic_0001>
module attributes {stable_mosaic.version = 11 : i64} {
  func.func @_fused_eval_kernel(%arg0: i32, %arg1: i32, %arg2: memref<1x1x512xi32, #tpu.memory_space<vmem>>, %arg3: memref<1x16x1xi32, #tpu.memory_space<vmem>>, %arg4: memref<1x3x16xf32, #tpu.memory_space<vmem>>, %arg5: memref<1x1x128xf32, #tpu.memory_space<vmem>>, %arg6: memref<16x1xi32, #tpu.memory_space<vmem>>) attributes {dimension_semantics = [#tpu.dimension_semantics<parallel>, #tpu.dimension_semantics<arbitrary>], iteration_bounds = array<i64: 1, 1>, scalar_prefetch = 0 : i64, scratch_operands = 1 : i64, tpu.core_type = #tpu.core_type<tc>, window_params = [{transform_indices = @transform_0, window_bounds = array<i64: 1, 1, 512>}, {transform_indices = @transform_1, window_bounds = array<i64: 1, 16, 1>}, {transform_indices = @transform_2, window_bounds = array<i64: 1, 3, 16>}, {transform_indices = @transform_3, window_bounds = array<i64: 1, 1, 128>}]} {
    %c0_i32 = arith.constant 0 : i32
    %0 = arith.cmpi eq, %arg1, %c0_i32 : i32
    %1 = arith.extui %0 : i1 to i32
    %c0_i32_0 = arith.constant 0 : i32
    %2 = arith.cmpi ne, %1, %c0_i32_0 : i32
    scf.if %2 {
      %c0_i32_12 = arith.constant 0 : i32
      %19 = vector.broadcast %c0_i32_12 : i32 to vector<16x1xi32>
      %c0_13 = arith.constant 0 : index
      %c0_14 = arith.constant 0 : index
      %20 = vector.load %arg6[%c0_13, %c0_14] : memref<16x1xi32, #tpu.memory_space<vmem>>, vector<16x1xi32>
      tpu.vector_store %arg6[%c0_13, %c0_14], %19 {strides = array<i32>} : memref<16x1xi32, #tpu.memory_space<vmem>>, vector<16x1xi32>,
    } else {
    }
    %c0 = arith.constant 0 : index
    %c0_1 = arith.constant 0 : index
    %c0_2 = arith.constant 0 : index
    %3 = vector.load %arg3[%c0, %c0_1, %c0_2] : memref<1x16x1xi32, #tpu.memory_space<vmem>>, vector<1x16x1xi32>
    %4 = vector.shape_cast %3 : vector<1x16x1xi32> to vector<16x1xi32>
    %c0_3 = arith.constant 0 : index
    %c0_4 = arith.constant 0 : index
    %c0_5 = arith.constant 0 : index
    %5 = vector.load %arg2[%c0_3, %c0_4, %c0_5] : memref<1x1x512xi32, #tpu.memory_space<vmem>>, vector<1x1x512xi32>
    %6 = vector.shape_cast %5 : vector<1x1x512xi32> to vector<1x512xi32>
    %7 = vector.broadcast %4 : vector<16x1xi32> to vector<16x512xi32>
    %8 = vector.broadcast %6 : vector<1x512xi32> to vector<16x512xi32>
    %9 = arith.cmpi eq, %7, %8 : vector<16x512xi32>
    %10 = arith.extui %9 : vector<16x512xi1> to vector<16x512xi32>
    %c0_6 = arith.constant 0 : index
    %c0_7 = arith.constant 0 : index
    %11 = vector.load %arg6[%c0_6, %c0_7] : memref<16x1xi32, #tpu.memory_space<vmem>>, vector<16x1xi32>
    %cst = arith.constant dense<-2147483648> : vector<16xi32>
    %12 = vector.multi_reduction <maxsi>, %10, %cst [1] : vector<16x512xi32> to vector<16xi32>
    %13 = vector.shape_cast %12 : vector<16xi32> to vector<16x1xi32>
    %14 = arith.maxsi %11, %13 : vector<16x1xi32>
    %c0_8 = arith.constant 0 : index
    %c0_9 = arith.constant 0 : index
    %15 = vector.load %arg6[%c0_8, %c0_9] : memref<16x1xi32, #tpu.memory_space<vmem>>, vector<16x1xi32>
    tpu.vector_store %arg6[%c0_8, %c0_9], %14 {strides = array<i32>} : memref<16x1xi32, #tpu.memory_space<vmem>>, vector<16x1xi32>,
    %c0_i32_10 = arith.constant 0 : i32
    %16 = arith.cmpi eq, %arg1, %c0_i32_10 : i32
    %17 = arith.extui %16 : i1 to i32
    %c0_i32_11 = arith.constant 0 : i32
    %18 = arith.cmpi ne, %17, %c0_i32_11 : i32
    scf.if %18 {
      %c0_12 = arith.constant 0 : index
      %c0_13 = arith.constant 0 : index
      %19 = vector.load %arg6[%c0_12, %c0_13] : memref<16x1xi32, #tpu.memory_space<vmem>>, vector<16x1xi32>
      %20 = arith.sitofp %19 : vector<16x1xi32> to vector<16x1xf32>
      %cst_14 = arith.constant dense<0.000000e+00> : vector<1xf32>
      %21 = vector.multi_reduction <add>, %20, %cst_14 [0] : vector<16x1xf32> to vector<1xf32>
      %22 = vector.shape_cast %21 : vector<1xf32> to vector<1x1xf32>
      %c0_15 = arith.constant 0 : index
      %c0_16 = arith.constant 0 : index
      %c0_17 = arith.constant 0 : index
      %23 = vector.load %arg4[%c0_15, %c0_16, %c0_17] : memref<1x3x16xf32, #tpu.memory_space<vmem>>, vector<1x3x16xf32>
      %24 = vector.shape_cast %23 : vector<1x3x16xf32> to vector<3x16xf32>
      %25 = vector.extract_strided_slice %24 {offsets = [0, 0], sizes = [1, 16], strides = [1, 1]} : vector<3x16xf32> to vector<1x16xf32>
      %26 = tpu.iota {dimensions = array<i32: 1>} : vector<1x16xi32>
      %c4_i32 = arith.constant 4 : i32
      %c0_i32_18 = arith.constant 0 : i32
      %27 = arith.cmpi eq, %c4_i32, %c0_i32_18 : i32
      %c1_i32 = arith.constant 1 : i32
      %28 = arith.select %27, %c1_i32, %c4_i32 : i32
      %29 = vector.broadcast %28 : i32 to vector<1x16xi32>
      %30 = arith.remsi %26, %29 : vector<1x16xi32>
      %c0_i32_19 = arith.constant 0 : i32
      %31 = vector.broadcast %c0_i32_19 : i32 to vector<1x16xi32>
      %32 = arith.cmpi ne, %30, %31 : vector<1x16xi32>
      %c0_i32_20 = arith.constant 0 : i32
      %33 = vector.broadcast %c0_i32_20 : i32 to vector<1x16xi32>
      %34 = arith.cmpi slt, %30, %33 : vector<1x16xi32>
      %c0_i32_21 = arith.constant 0 : i32
      %35 = arith.cmpi slt, %28, %c0_i32_21 : i32
      %36 = vector.broadcast %35 : i1 to vector<1x16xi1>
      %37 = vector.broadcast %36 : vector<1x16xi1> to vector<1x16xi1>
      %38 = arith.xori %34, %37 : vector<1x16xi1>
      %39 = arith.andi %38, %32 : vector<1x16xi1>
      %40 = vector.broadcast %28 : i32 to vector<1x16xi32>
      %41 = arith.addi %30, %40 : vector<1x16xi32>
      %42 = arith.select %39, %41, %30 : vector<1x16xi1>, vector<1x16xi32>
      %c12_i32 = arith.constant 12 : i32
      %43 = vector.broadcast %c12_i32 : i32 to vector<1x16xi32>
      %44 = arith.cmpi slt, %26, %43 : vector<1x16xi32>
      %c3_i32 = arith.constant 3 : i32
      %45 = vector.broadcast %c3_i32 : i32 to vector<1x16xi32>
      %46 = arith.cmpi slt, %42, %45 : vector<1x16xi32>
      %47 = arith.andi %44, %46 : vector<1x16xi1>
      %c12_i32_22 = arith.constant 12 : i32
      %48 = vector.broadcast %c12_i32_22 : i32 to vector<1x16xi32>
      %49 = arith.cmpi slt, %26, %48 : vector<1x16xi32>
      %c3_i32_23 = arith.constant 3 : i32
      %50 = vector.broadcast %c3_i32_23 : i32 to vector<1x16xi32>
      %51 = arith.cmpi eq, %42, %50 : vector<1x16xi32>
      %52 = arith.andi %49, %51 : vector<1x16xi1>
      %53 = vector.extract_strided_slice %24 {offsets = [1, 0], sizes = [1, 16], strides = [1, 1]} : vector<3x16xf32> to vector<1x16xf32>
      %54 = arith.mulf %25, %53 : vector<1x16xf32>
      %cst_24 = arith.constant 0.000000e+00 : f32
      %55 = vector.broadcast %cst_24 : f32 to vector<1x16xf32>
      %56 = arith.select %47, %54, %55 : vector<1x16xi1>, vector<1x16xf32>
      %cst_25 = arith.constant dense<0.000000e+00> : vector<1xf32>
      %57 = vector.multi_reduction <add>, %56, %cst_25 [1] : vector<1x16xf32> to vector<1xf32>
      %58 = vector.shape_cast %57 : vector<1xf32> to vector<1x1xf32>
      %cst_26 = arith.constant 1.000000e+00 : f32
      %59 = vector.broadcast %cst_26 : f32 to vector<1x1xf32>
      %60 = arith.subf %58, %59 : vector<1x1xf32>
      %cst_27 = arith.constant 5.000000e-01 : f32
      %61 = vector.broadcast %cst_27 : f32 to vector<1x1xf32>
      %62 = arith.mulf %61, %60 : vector<1x1xf32>
      %cst_28 = arith.constant -1.000000e+00 : f32
      %cst_29 = arith.constant 1.000000e+00 : f32
      %63 = vector.broadcast %cst_28 : f32 to vector<1x1xf32>
      %64 = arith.maximumf %63, %62 : vector<1x1xf32>
      %65 = vector.broadcast %cst_29 : f32 to vector<1x1xf32>
      %66 = arith.minimumf %65, %64 : vector<1x1xf32>
      %67 = arith.subf %25, %53 : vector<1x16xf32>
      %cst_30 = arith.constant 0.000000e+00 : f32
      %68 = vector.broadcast %cst_30 : f32 to vector<1x16xf32>
      %69 = arith.select %52, %67, %68 : vector<1x16xi1>, vector<1x16xf32>
      %70 = arith.mulf %69, %69 : vector<1x16xf32>
      %cst_31 = arith.constant dense<0.000000e+00> : vector<1xf32>
      %71 = vector.multi_reduction <add>, %70, %cst_31 [1] : vector<1x16xf32> to vector<1xf32>
      %72 = vector.shape_cast %71 : vector<1xf32> to vector<1x1xf32>
      %73 = math.sqrt %72 : vector<1x1xf32>
      %74 = vector.extract_strided_slice %24 {offsets = [2, 0], sizes = [1, 16], strides = [1, 1]} : vector<3x16xf32> to vector<1x16xf32>
      %75 = arith.mulf %25, %74 : vector<1x16xf32>
      %cst_32 = arith.constant 0.000000e+00 : f32
      %76 = vector.broadcast %cst_32 : f32 to vector<1x16xf32>
      %77 = arith.select %47, %75, %76 : vector<1x16xi1>, vector<1x16xf32>
      %cst_33 = arith.constant dense<0.000000e+00> : vector<1xf32>
      %78 = vector.multi_reduction <add>, %77, %cst_33 [1] : vector<1x16xf32> to vector<1xf32>
      %79 = vector.shape_cast %78 : vector<1xf32> to vector<1x1xf32>
      %cst_34 = arith.constant 1.000000e+00 : f32
      %80 = vector.broadcast %cst_34 : f32 to vector<1x1xf32>
      %81 = arith.subf %79, %80 : vector<1x1xf32>
      %cst_35 = arith.constant 5.000000e-01 : f32
      %82 = vector.broadcast %cst_35 : f32 to vector<1x1xf32>
      %83 = arith.mulf %82, %81 : vector<1x1xf32>
      %cst_36 = arith.constant -1.000000e+00 : f32
      %cst_37 = arith.constant 1.000000e+00 : f32
      %84 = vector.broadcast %cst_36 : f32 to vector<1x1xf32>
      %85 = arith.maximumf %84, %83 : vector<1x1xf32>
      %86 = vector.broadcast %cst_37 : f32 to vector<1x1xf32>
      %87 = arith.minimumf %86, %85 : vector<1x1xf32>
      %88 = arith.subf %25, %74 : vector<1x16xf32>
      %cst_38 = arith.constant 0.000000e+00 : f32
      %89 = vector.broadcast %cst_38 : f32 to vector<1x16xf32>
      %90 = arith.select %52, %88, %89 : vector<1x16xi1>, vector<1x16xf32>
      %91 = arith.mulf %90, %90 : vector<1x16xf32>
      %cst_39 = arith.constant dense<0.000000e+00> : vector<1xf32>
      %92 = vector.multi_reduction <add>, %91, %cst_39 [1] : vector<1x16xf32> to vector<1xf32>
      %93 = vector.shape_cast %92 : vector<1xf32> to vector<1x1xf32>
      %94 = math.sqrt %93 : vector<1x1xf32>
      %95 = tpu.iota {dimensions = array<i32: 1>} : vector<1x128xi32>
      %c0_i32_40 = arith.constant 0 : i32
      %96 = vector.broadcast %c0_i32_40 : i32 to vector<1x128xi32>
      %97 = arith.cmpi eq, %95, %96 : vector<1x128xi32>
      %cst_41 = arith.constant 0.000000e+00 : f32
      %98 = vector.shape_cast %22 : vector<1x1xf32> to vector<1x1xf32>
      %99 = vector.broadcast %98 : vector<1x1xf32> to vector<1x128xf32>
      %100 = vector.broadcast %cst_41 : f32 to vector<1x128xf32>
      %101 = arith.select %97, %99, %100 : vector<1x128xi1>, vector<1x128xf32>
      %c1_i32_42 = arith.constant 1 : i32
      %102 = vector.broadcast %c1_i32_42 : i32 to vector<1x128xi32>
      %103 = arith.cmpi eq, %95, %102 : vector<1x128xi32>
      %cst_43 = arith.constant 0.000000e+00 : f32
      %104 = vector.shape_cast %66 : vector<1x1xf32> to vector<1x1xf32>
      %105 = vector.broadcast %104 : vector<1x1xf32> to vector<1x128xf32>
      %106 = vector.broadcast %cst_43 : f32 to vector<1x128xf32>
      %107 = arith.select %103, %105, %106 : vector<1x128xi1>, vector<1x128xf32>
      %108 = arith.addf %101, %107 : vector<1x128xf32>
      %c2_i32 = arith.constant 2 : i32
      %109 = vector.broadcast %c2_i32 : i32 to vector<1x128xi32>
      %110 = arith.cmpi eq, %95, %109 : vector<1x128xi32>
      %cst_44 = arith.constant 0.000000e+00 : f32
      %111 = vector.shape_cast %73 : vector<1x1xf32> to vector<1x1xf32>
      %112 = vector.broadcast %111 : vector<1x1xf32> to vector<1x128xf32>
      %113 = vector.broadcast %cst_44 : f32 to vector<1x128xf32>
      %114 = arith.select %110, %112, %113 : vector<1x128xi1>, vector<1x128xf32>
      %115 = arith.addf %108, %114 : vector<1x128xf32>
      %c3_i32_45 = arith.constant 3 : i32
      %116 = vector.broadcast %c3_i32_45 : i32 to vector<1x128xi32>
      %117 = arith.cmpi eq, %95, %116 : vector<1x128xi32>
      %cst_46 = arith.constant 0.000000e+00 : f32
      %118 = vector.shape_cast %87 : vector<1x1xf32> to vector<1x1xf32>
      %119 = vector.broadcast %118 : vector<1x1xf32> to vector<1x128xf32>
      %120 = vector.broadcast %cst_46 : f32 to vector<1x128xf32>
      %121 = arith.select %117, %119, %120 : vector<1x128xi1>, vector<1x128xf32>
      %122 = arith.addf %115, %121 : vector<1x128xf32>
      %c4_i32_47 = arith.constant 4 : i32
      %123 = vector.broadcast %c4_i32_47 : i32 to vector<1x128xi32>
      %124 = arith.cmpi eq, %95, %123 : vector<1x128xi32>
      %cst_48 = arith.constant 0.000000e+00 : f32
      %125 = vector.shape_cast %94 : vector<1x1xf32> to vector<1x1xf32>
      %126 = vector.broadcast %125 : vector<1x1xf32> to vector<1x128xf32>
      %127 = vector.broadcast %cst_48 : f32 to vector<1x128xf32>
      %128 = arith.select %124, %126, %127 : vector<1x128xi1>, vector<1x128xf32>
      %129 = arith.addf %122, %128 : vector<1x128xf32>
      %c0_49 = arith.constant 0 : index
      %c0_50 = arith.constant 0 : index
      %c0_51 = arith.constant 0 : index
      %130 = vector.load %arg5[%c0_49, %c0_50, %c0_51] : memref<1x1x128xf32, #tpu.memory_space<vmem>>, vector<1x1x128xf32>
      %131 = vector.shape_cast %130 : vector<1x1x128xf32> to vector<1x128xf32>
      %132 = vector.shape_cast %129 : vector<1x128xf32> to vector<1x1x128xf32>
      tpu.vector_store %arg5[%c0_49, %c0_50, %c0_51], %132 {strides = array<i32>} : memref<1x1x128xf32, #tpu.memory_space<vmem>>, vector<1x1x128xf32>,
    } else {
    }
    return
  }
  func.func @transform_0(%arg0: i32, %arg1: i32) -> (i32, i32, i32) {
    %c0_i32 = arith.constant 0 : i32
    %c0_i32_0 = arith.constant 0 : i32
    return %arg0, %c0_i32, %arg1 : i32, i32, i32
  }
  func.func @transform_1(%arg0: i32, %arg1: i32) -> (i32, i32, i32) {
    %c0_i32 = arith.constant 0 : i32
    %c0_i32_0 = arith.constant 0 : i32
    %c0_i32_1 = arith.constant 0 : i32
    return %arg0, %c0_i32, %c0_i32_0 : i32, i32, i32
  }
  func.func @transform_2(%arg0: i32, %arg1: i32) -> (i32, i32, i32) {
    %c0_i32 = arith.constant 0 : i32
    %c0_i32_0 = arith.constant 0 : i32
    %c0_i32_1 = arith.constant 0 : i32
    return %arg0, %c0_i32, %c0_i32_0 : i32, i32, i32
  }
  func.func @transform_3(%arg0: i32, %arg1: i32) -> (i32, i32, i32) {
    %c0_i32 = arith.constant 0 : i32
    %c0_i32_0 = arith.constant 0 : i32
    %c0_i32_1 = arith.constant 0 : i32
    return %arg0, %c0_i32, %c0_i32_0 : i32, i32, i32
  }
}

</mosaic_0001>

<llo_original>
// kernel: _evaluator_device_fn.1
$region0: #{_evaluator_device_fn.1}
  #allocation0 [shape = 'u32[]', space=smem, size = 0x4, offset = 0x4, fixed_abs, tag = 'smem constant byte address 0x4 - core index']
  #allocation1 [shape = 'u32[72,128]{1,0:T(1,128)}', space=vmem, size = 0x9000, scoped, tag = 'internal scratch']
  #allocation2 [shape = 's32[16,1]{1,0:T(8,128)}', space=vmem, size = 0x2000, scoped, tag = 'scratch operand']
  %s0 = inlined_call_operand.vmem [shape: s32[1,1,512], index: 0, kind: input, shape index: {}]
  %s1 = inlined_call_operand.vmem [shape: s32[1,16,1], index: 1, kind: input, shape index: {}]
  %s2 = inlined_call_operand.vmem [shape: f32[1,3,16], index: 2, kind: input, shape index: {}]
  %s3 = inlined_call_operand.vmem [shape: f32[1,1,128], index: 3, kind: output, shape index: {}]
  %s4 = sld [smem:[#allocation0]]
  $region30: #{_evaluator_device_fn.1} parent=0
    _
  %s6 = ssub.s32 1, %s4
  %s7 = scalar_select 0, %s6, %s4
  // Predicated region
  $region2: #{_evaluator_device_fn.1} parent=0 // pred_check
    _
  $region3: #{_evaluator_device_fn.1} parent=0 // pred_check_branch
    %9 = sbr.rel (0) target = $region5
  $region4: #{_evaluator_device_fn.1} parent=0 // pred_region
    _
  $region5: #{_evaluator_device_fn.1} parent=0 // pred_fallthru
    _
  // Predicated region
  $region6: #{_evaluator_device_fn.1} parent=0 // pred_check
    _
  $region7: #{_evaluator_device_fn.1} parent=0 // pred_check_branch
    %11 = sbr.rel (0) target = $region9
  $region8: #{_evaluator_device_fn.1} parent=0 // pred_region
    _
  $region9: #{_evaluator_device_fn.1} parent=0 // pred_fallthru
    _
  // Predicated region
  $region10: #{_evaluator_device_fn.1} parent=0 // pred_check
    _
  $region11: #{_evaluator_device_fn.1} parent=0 // pred_check_branch
    %13 = sbr.rel (0) target = $region13
  $region12: #{_evaluator_device_fn.1} parent=0 // pred_region
    _
  $region13: #{_evaluator_device_fn.1} parent=0 // pred_fallthru
    _
  %p14 = scmp.eq.s32.totalorder 0, 0
  // Predicated region
  $region14: #{_evaluator_device_fn.1} parent=0 // pred_check
    %p15 = pneg %p14
  $region15: #{_evaluator_device_fn.1} parent=0 // pred_check_branch
    %17 = sbr.rel (%p15) target = $region17
  $region16: #{_evaluator_device_fn.1} parent=0 // pred_region
    %vm18 = vcmask 7168
    %19 = vst.msk [vmem:[#allocation2] sm:$0xff] %vm18, 0
    %20 = vst.msk [vmem:[#allocation2 + $0x8] sm:$0xff] %vm18, 0
  $region17: #{_evaluator_device_fn.1} parent=0 // pred_fallthru
    _
  %v21 = vld [vmem:[%s1] sm:$0xff]
  %v22 = vld [vmem:[%s1 + $0x8] sm:$0xff]
  %v23 = vld [vmem:[%s0] sm:$0xf]
  %24 = vset.pattern.permute.xlu0 0
  %25 = vperm.xlu0 %24, %v21
  %v26 = vpop.permute.xlu0 %25
  %27 = vset.pattern.permute.xlu0 0
  %28 = vperm.xlu0 %27, %v22
  %v29 = vpop.permute.xlu0 %28
  %v30 = vperm.slane %v23, 0
  %v31 = vperm.slane %v23, 1
  %v32 = vperm.slane %v23, 2
  %v33 = vperm.slane %v23, 3
  %vm34 = vcmp.eq.s32.totalorder %v26, %v30
  %vm35 = vcmp.eq.s32.totalorder %v26, %v31
  %vm36 = vcmp.eq.s32.totalorder %v26, %v32
  %vm37 = vcmp.eq.s32.totalorder %v26, %v33
  %vm38 = vcmp.eq.s32.totalorder %v29, %v30
  %vm39 = vcmp.eq.s32.totalorder %v29, %v31
  %vm40 = vcmp.eq.s32.totalorder %v29, %v32
  %vm41 = vcmp.eq.s32.totalorder %v29, %v33
  %v42 = vsel %vm34, 1, 0
  %v43 = vsel %vm35, 1, 0
  %v44 = vsel %vm36, 1, 0
  %v45 = vsel %vm37, 1, 0
  %v46 = vsel %vm38, 1, 0
  %v47 = vsel %vm39, 1, 0
  %v48 = vsel %vm40, 1, 0
  %v49 = vsel %vm41, 1, 0
  %v50 = vld [vmem:[#allocation2] sm:$0xff]
  %v51 = vld [vmem:[#allocation2 + $0x8] sm:$0xff]
  %vm52 = vcmp.gt.s32.totalorder %v42, %v44
  %v53 = vsel %vm52, %v42, %v44
  %vm54 = vcmp.gt.s32.totalorder %v43, %v45
  %v55 = vsel %vm54, %v43, %v45
  %vm56 = vcmp.gt.s32.totalorder %v53, %v55
  %v57 = vsel %vm56, %v53, %v55
  %v58 = vand.u32 %v57, 65535
  %v59 = vshra.s32 %v57, 16
  %v60 = vcvt.s32.f32 %v58
  %v61 = vcvt.s32.f32 %v59
  %62 = vmax.xlane.f32.xlu0 %v61
  %v63 = vpop.xlane.xlu0 %62
  %vm64 = vcmp.eq.f32.partialorder %v61, %v63
  %v65 = vsel %vm64, %v60, -inf
  %66 = vmax.xlane.f32.xlu0 %v65
  %v67 = vpop.xlane.xlu0 %66
  %v68 = vcvt.f32.s32 %v67
  %v69 = vcvt.f32.s32 %v63
  %v70 = vshll.u32 %v69, 16
  %v71 = vadd.s32 %v70, %v68
  %vm72 = vcmp.gt.s32.totalorder %v46, %v48
  %v73 = vsel %vm72, %v46, %v48
  %vm74 = vcmp.gt.s32.totalorder %v47, %v49
  %v75 = vsel %vm74, %v47, %v49
  %vm76 = vcmp.gt.s32.totalorder %v73, %v75
  %v77 = vsel %vm76, %v73, %v75
  %v78 = vand.u32 %v77, 65535
  %v79 = vshra.s32 %v77, 16
  %v80 = vcvt.s32.f32 %v78
  %v81 = vcvt.s32.f32 %v79
  %82 = vmax.xlane.f32.xlu0 %v81
  %v83 = vpop.xlane.xlu0 %82
  %vm84 = vcmp.eq.f32.partialorder %v81, %v83
  %v85 = vsel %vm84, %v80, -inf
  %86 = vmax.xlane.f32.xlu0 %v85
  %v87 = vpop.xlane.xlu0 %86
  %v88 = vcvt.f32.s32 %v87
  %v89 = vcvt.f32.s32 %v83
  %v90 = vshll.u32 %v89, 16
  %v91 = vadd.s32 %v90, %v88
  %vm92 = vcmp.gt.s32.totalorder %v50, %v71
  %v93 = vsel %vm92, %v50, %v71
  %vm94 = vcmp.gt.s32.totalorder %v51, %v91
  %v95 = vsel %vm94, %v51, %v91
  %vm96 = vcmask 7168
  %97 = vst.msk [vmem:[#allocation2] sm:$0xff] %vm96, %v93
  %98 = vst.msk [vmem:[#allocation2 + $0x8] sm:$0xff] %vm96, %v95
  // Predicated region
  $region18: #{_evaluator_device_fn.1} parent=0 // pred_check
    %p99 = pneg %p14
  $region19: #{_evaluator_device_fn.1} parent=0 // pred_check_branch
    %101 = sbr.rel (%p99) target = $region21
  $region20: #{_evaluator_device_fn.1} parent=0 // pred_region
    %v102 = vld [vmem:[#allocation2] sm:$0xff]
    %v103 = vld [vmem:[#allocation2 + $0x8] sm:$0xff]
    %v104 = vcvt.s32.f32 %v102
    %v105 = vcvt.s32.f32 %v103
    %v106 = vsel %vm96, %v104, 0.0
    %v107 = vsel %vm96, %v105, 0.0
    %v108 = vadd.f32 %v106, %v107
    %v109 = vrot.slane %v108, 4
    %v110 = vadd.f32 %v108, %v109
    %v111 = vrot.slane %v110, 2
    %v112 = vadd.f32 %v110, %v111
    %v113 = vrot.slane %v112, 1
    %v114 = vadd.f32 %v112, %v113
    %v115 = vld [vmem:[%s2] sm:$0x7]
    %v116 = vlaneseq
    %v117 = vand.u32 %v116, 127
    %vm118 = vcmp.lt.s32.totalorder %v117, 0
    %v119 = vsub.s32 0, %v117
    %v120 = vsel %vm118, %v119, %v117
    %v121 = vshrl.u32 %v120, 2
    %v122 = vand.u32 %v120, 3
    %v123 = vsub.s32 0, %v122
    %v124 = vsel %vm118, %v123, %v122
    %vm125 = vcmp.ne.s32.totalorder %v124, 0
    %vm126 = vcmp.lt.s32.totalorder %v124, 0
    %vm127 = vmand %vm126, %vm125
    %v128 = vadd.s32 %v124, 4
    %v129 = vsel %vm127, %v128, %v124
    %vm130 = vcmp.lt.s32.totalorder %v117, 12
    %vm131 = vcmp.lt.s32.totalorder %v129, 3
    %vm132 = vmand %vm130, %vm131
    %vm133 = vcmp.eq.s32.totalorder %v129, 3
    %vm134 = vmand %vm130, %vm133
    %v136 = vrot.slane %v115, 1
    %v138 = vmul.f32 %v115, %v136
    %v139 = vsel %vm132, %v138, 0.0
    %vm140 = vcmask 122880
    %v141 = vsel %vm140, %v139, 0.0
    %142 = vadd.xlane.f32.xlu0 %v141
    %v143 = vpop.xlane.xlu0 %142
    %v144 = vsub.f32 %v143, 1.0
    %v145 = vmul.f32 %v144, 0.5
    %v146 = vmax.f32 %v145, -1.0
    %v147 = vmin.f32 %v146, 1.0
    %v148 = vsub.f32 %v115, %v136
    %v149 = vsel %vm134, %v148, 0.0
    %v150 = vmul.f32 %v149, %v149
    %v151 = vsel %vm140, %v150, 0.0
    %152 = vadd.xlane.f32.xlu0 %v151
    %v153 = vpop.xlane.xlu0 %152
    %v154 = vrsqrt.pop %v153
    %v155 = vmul.f32 %v154, %v153
    %v156 = vmul.f32 %v155, %v154
    %v157 = vmul.f32 0.5, %v156
    %v158 = vsub.f32 1.5, %v157
    %v159 = vmul.f32 %v154, %v158
    %v160 = vmul.f32 %v153, %v159
    %vm161 = vcmp.eq.f32.partialorder %v153, inf
    %v162 = vsel %vm161, %v153, %v160
    %vm163 = vcmp.eq.f32.partialorder %v153, 0.0
    %v164 = vand.u32 %v153, 2147483648
    %v165 = vsel %vm163, %v164, %v162
    %v166 = vrot.slane %v115, 2
    %v168 = vmul.f32 %v115, %v166
    %v169 = vsel %vm132, %v168, 0.0
    %v170 = vsel %vm140, %v169, 0.0
    %171 = vadd.xlane.f32.xlu0 %v170
    %v172 = vpop.xlane.xlu0 %171
    %v173 = vsub.f32 %v172, 1.0
    %v174 = vmul.f32 %v173, 0.5
    %v175 = vmax.f32 %v174, -1.0
    %v176 = vmin.f32 %v175, 1.0
    %v177 = vsub.f32 %v115, %v166
    %v178 = vsel %vm134, %v177, 0.0
    %v179 = vmul.f32 %v178, %v178
    %v180 = vsel %vm140, %v179, 0.0
    %181 = vadd.xlane.f32.xlu0 %v180
    %v182 = vpop.xlane.xlu0 %181
    %v183 = vrsqrt.pop %v182
    %v184 = vmul.f32 %v183, %v182
    %v185 = vmul.f32 %v184, %v183
    %v186 = vmul.f32 0.5, %v185
    %v187 = vsub.f32 1.5, %v186
    %v188 = vmul.f32 %v183, %v187
    %v189 = vmul.f32 %v182, %v188
    %vm190 = vcmp.eq.f32.partialorder %v182, inf
    %v191 = vsel %vm190, %v182, %v189
    %vm192 = vcmp.eq.f32.partialorder %v182, 0.0
    %v193 = vand.u32 %v182, 2147483648
    %v194 = vsel %vm192, %v193, %v191
    %vm195 = vcmp.eq.s32.totalorder %v117, 0
    %197 = vset.pattern.permute.xlu0 0
    %198 = vperm.xlu0 %197, %v114
    %v199 = vpop.permute.xlu0 %198
    %v201 = vsel %vm195, %v199, 0.0
    %vm202 = vcmp.eq.s32.totalorder %v117, 1
    %v203 = vsel %vm202, %v147, 0.0
    %v204 = vadd.f32 %v201, %v203
    %vm205 = vcmp.eq.s32.totalorder %v117, 2
    %v206 = vsel %vm205, %v165, 0.0
    %v207 = vadd.f32 %v204, %v206
    %vm208 = vcmp.eq.s32.totalorder %v117, 3
    %v209 = vsel %vm208, %v176, 0.0
    %v210 = vadd.f32 %v207, %v209
    %vm211 = vcmp.eq.s32.totalorder %v117, 4
    %v212 = vsel %vm211, %v194, 0.0
    %v213 = vadd.f32 %v210, %v212
    %214 = vst [vmem:[%s3] sm:$0x1] %v213
  $region21: #{_evaluator_device_fn.1} parent=0 // pred_fallthru
    _
  // Predicated region
  $region22: #{_evaluator_device_fn.1} parent=0 // pred_check
    _
  $region23: #{_evaluator_device_fn.1} parent=0 // pred_check_branch
    %216 = sbr.rel (0) target = $region25
  $region24: #{_evaluator_device_fn.1} parent=0 // pred_region
    _
  $region25: #{_evaluator_device_fn.1} parent=0 // pred_fallthru
    _
  // Predicated region
  $region26: #{_evaluator_device_fn.1} parent=0 // pred_check
    _
  $region27: #{_evaluator_device_fn.1} parent=0 // pred_check_branch
    %218 = sbr.rel (0) target = $region29
  $region28: #{_evaluator_device_fn.1} parent=0 // pred_region
    _
  $region29: #{_evaluator_device_fn.1} parent=0 // pred_fallthru
    _

</llo_original>
